<compile_context>
chip_gen: v6e
topology: v6e:2x2x1
jax: 0.10.0
libtpu: 0.0.40
codegen_flags: <defaults>
</compile_context>

<pallas_src>
import math
import numpy as np
import jax
import jax.numpy as jnp
from jax.experimental import pallas as pl
from jax.experimental.pallas import tpu as pltpu


def _round_up(n, m):
    return ((n + m - 1) // m) * m


def _pack_factor(K, D, max_p=64):
    """Rows packed per lane-dense row.

    Smallest P with P*K % 128 == 0 and P*D % 128 == 0 (lane-dense LHS *and*
    output); falls back to lane-dense output only, then to 1.
    """
    pd = 128 // math.gcd(D, 128)
    pk = 128 // math.gcd(K, 128)
    P = pd * pk // math.gcd(pd, pk)          # lcm(pd, pk)
    if P <= max_p:
        return P
    if pd <= max_p:
        return pd
    return 1


# ----- Pallas kernel ---------------------------------------------------------
def tfe_kernel(x_ref, w_ref, o_ref):
    # x_ref: [Rpb, P*K]  P original (b, l) rows packed per lane-dense row
    # w_ref: [P*K, P*D]  block-diagonal replicated Linear weight (VMEM-resident)
    # o_ref: [Rpb, P*D]  lane-dense output (P*D is a multiple of 128)
    o_ref[...] = jnp.dot(
        x_ref[...], w_ref[...], preferred_element_type=jnp.float32
    ).astype(o_ref.dtype)


# ----- wrapper ---------------------------------------------------------------
def time_feature_embedding(x, weight, *, block_rows=1024, out_dtype=jnp.float32):
    """TimeFeatureEmbedding forward: x @ weight.T (bias-free nn.Linear).

    x:      [B, L, d_inp] float32 time features
    weight: [d_model, d_inp] float32 (PyTorch nn.Linear weight layout)
    returns [B, L, d_model] in `out_dtype` (keep float32 for exact parity;
            bf16 halves the dominant output HBM traffic if downstream allows).
    """
    B, L, K = x.shape
    D = weight.shape[0]
    wT = jnp.asarray(weight, jnp.float32).T                        # [K, D]

    P = _pack_factor(K, D)
    Kp, Np = P * K, P * D
    # Block-diagonal weight: packed_row @ wp == P independent x_row @ W.T.
    wp = jnp.kron(jnp.eye(P, dtype=jnp.float32), wT)               # [Kp, Np]

    # Flatten (B, L) into one row axis and lane-pack P rows per packed row.
    R = B * L
    Rp = max(pl.cdiv(R, P), 8)          # packed rows (>= 8 sublanes for tiny inputs)
    R_pad = Rp * P

    xf = x.reshape(R, K).astype(jnp.float32)
    if R_pad != R:
        # Extra HBM round trip of the input -- only taken when B*L is not a
        # multiple of the packing factor (common TimeMixer shapes skip it).
        xf = jnp.pad(xf, ((0, R_pad - R), (0, 0)))
    xp = xf.reshape(Rp, Kp)

    # Row-block size: as large as safely fits the default scoped-VMEM budget on
    # every generation (double-buffered in+out tiles, ~12 MiB << 16 MiB v5e /
    # 32 MiB v7x defaults), but split into >= 2 grid steps when there is enough
    # work so v7x's two TensorCores both issue DMAs.
    bytes_per_packed_row = 2 * (Kp + Np) * 4          # double-buffered, f32
    vmem_budget = 12 * 1024 * 1024
    rpb_cap = max(8, (vmem_budget // bytes_per_packed_row) // 8 * 8)
    Rpb = min(_round_up(block_rows, 8), rpb_cap, _round_up(Rp, 8))
    if Rp > 16:
        Rpb = min(Rpb, _round_up(pl.cdiv(Rp, 2), 8))  # guarantee >= 2 grid steps
    num_blocks = pl.cdiv(Rp, Rpb)
    if num_blocks == 1:
        Rpb = Rp                                      # full-extent block is always legal

    cost = pl.CostEstimate(
        flops=2 * Rp * Kp * Np,
        transcendentals=0,
        bytes_accessed=(Rp * Kp + Kp * Np + Rp * Np) * 4,
    )

    out_packed = pl.pallas_call(
        tfe_kernel,
        out_shape=jax.ShapeDtypeStruct((Rp, Np), out_dtype),
        grid_spec=pltpu.PrefetchScalarGridSpec(
            num_scalar_prefetch=0,
            grid=(num_blocks,),
            in_specs=[
                pl.BlockSpec((Rpb, Kp), lambda i: (i, 0)),
                pl.BlockSpec((Kp, Np), lambda i: (0, 0)),   # resident weight
            ],
            out_specs=pl.BlockSpec((Rpb, Np), lambda i: (i, 0)),
        ),
        compiler_params=pltpu.CompilerParams(
            dimension_semantics=("parallel",)),   # megacore / 2-TC split on v7x
        cost_estimate=cost,
    )(xp, wp)

    # Unpack outside the kernel (cheap XLA reshape of a lane-dense slab).
    return out_packed.reshape(R_pad, D)[:R].reshape(B, L, D)


# ----- pure-JAX reference -----------------------------------------------------
def reference(x, weight):
    return jnp.einsum("blk,dk->bld", x, weight)


if __name__ == "__main__":
    # small shapes consistent with the module (freq='h' -> d_inp=4)
    B, L, d_inp, d_model = 2, 8, 4, 32
    key = jax.random.PRNGKey(0)
    kx, kw = jax.random.split(key)

    x = jax.random.normal(kx, (B, L, d_inp), dtype=jnp.float32)

    # nn.Linear default init: U(-1/sqrt(fan_in), 1/sqrt(fan_in)), no bias.
    bound = 1.0 / math.sqrt(d_inp)
    weight = jax.random.uniform(kw, (d_model, d_inp), jnp.float32,
                                minval=-bound, maxval=bound)

    out = jax.block_until_ready(time_feature_embedding(x, weight))

    ref = reference(x, weight)
    np.testing.assert_allclose(np.asarray(out), np.asarray(ref),
                               rtol=1e-5, atol=1e-5)
    print("KERNEL_OK")
</pallas_src>

<mosaic_0001>
module attributes {stable_mosaic.version = 11 : i64} {
  func.func @tfe_kernel(%arg0: i32, %arg1: memref<8x128xf32, #tpu.memory_space<vmem>>, %arg2: memref<128x1024xf32, #tpu.memory_space<vmem>>, %arg3: memref<8x1024xf32, #tpu.memory_space<vmem>>) attributes {dimension_semantics = [#tpu.dimension_semantics<parallel>], iteration_bounds = array<i64: 1>, scalar_prefetch = 0 : i64, scratch_operands = 0 : i64, tpu.core_type = #tpu.core_type<tc>, window_params = [{transform_indices = @transform_0, window_bounds = array<i64: 8, 128>}, {pipeline_mode = #tpu.pipeline_mode<synchronous>, transform_indices = @transform_1, window_bounds = array<i64: 128, 1024>}, {transform_indices = @transform_2, window_bounds = array<i64: 8, 1024>}]} {
    %c0 = arith.constant 0 : index
    %c0_0 = arith.constant 0 : index
    %0 = vector.load %arg1[%c0, %c0_0] : memref<8x128xf32, #tpu.memory_space<vmem>>, vector<8x128xf32>
    %c0_1 = arith.constant 0 : index
    %c0_2 = arith.constant 0 : index
    %1 = vector.load %arg2[%c0_1, %c0_2] : memref<128x1024xf32, #tpu.memory_space<vmem>>, vector<128x1024xf32>
    %cst = arith.constant dense<0.000000e+00> : vector<8x1024xf32>
    %2 = tpu.matmul %0, %1, %cst {dimension_numbers = #tpu.dot_dimension_numbers<[1], [0], [0], [1], [0, 0, 1, 1], [], []>} : vector<8x128xf32>, vector<128x1024xf32>, vector<8x1024xf32> -> vector<8x1024xf32>
    %c0_3 = arith.constant 0 : index
    %c0_4 = arith.constant 0 : index
    %3 = vector.load %arg3[%c0_3, %c0_4] : memref<8x1024xf32, #tpu.memory_space<vmem>>, vector<8x1024xf32>
    tpu.vector_store %arg3[%c0_3, %c0_4], %2 {strides = array<i32>} : memref<8x1024xf32, #tpu.memory_space<vmem>>, vector<8x1024xf32>,
    return
  }
  func.func @transform_0(%arg0: i32) -> (i32, i32) {
    %c0_i32 = arith.constant 0 : i32
    %c0_i32_0 = arith.constant 0 : i32
    return %arg0, %c0_i32 : i32, i32
  }
  func.func @transform_1(%arg0: i32) -> (i32, i32) {
    %c0_i32 = arith.constant 0 : i32
    %c0_i32_0 = arith.constant 0 : i32
    %c0_i32_1 = arith.constant 0 : i32
    return %c0_i32, %c0_i32_0 : i32, i32
  }
  func.func @transform_2(%arg0: i32) -> (i32, i32) {
    %c0_i32 = arith.constant 0 : i32
    %c0_i32_0 = arith.constant 0 : i32
    return %arg0, %c0_i32 : i32, i32
  }
}

</mosaic_0001>

<llo_original>
// kernel: tpu_custom_call.1
$region0: #{tpu_custom_call.1}
  #allocation0 [shape = 'u32[]', space=smem, size = 0x4, offset = 0x4, fixed_abs, tag = 'smem constant byte address 0x4 - core index']
  #allocation1 [shape = 'u32[144,128]{1,0:T(1,128)}', space=vmem, size = 0x12000, scoped, tag = 'internal scratch']
  %s0 = inlined_call_operand.hbm [shape: f32[8,128], index: 0, kind: input, shape index: {}]
  %s1 = inlined_call_operand.hbm [shape: f32[128,1024], index: 1, kind: input, shape index: {}]
  %s2 = inlined_call_operand.hbm [shape: f32[8,1024], index: 2, kind: output, shape index: {}]
  %s3 = sld [smem:[#allocation0]]
  $region26: #{tpu_custom_call.1} parent=0
    _
  %s5 = ssub.s32 1, %s3
  %s6 = scalar_select 0, %s5, %s3
  $region1: #{tpu_custom_call.1} parent=0
    #allocation2 [shape = 'u8[4096]{0}', space=vmem, size = 0x1000, scoped, tag = 'input window, operand 0, single buffered']
    #allocation3 [shape = 's32[1]{0}', space=sflag, size = 0x4, scoped, tag = 'scoped memory for tpu_custom_call.1']
    #allocation4 [shape = 's32[1]{0}', space=sflag, size = 0x4, scoped, tag = 'scoped memory for tpu_custom_call.1']
    #allocation5 [shape = 'u8[524288]{0}', space=vmem, size = 0x80000, scoped, tag = 'input window, operand 1, single buffered']
    #allocation6 [shape = 's32[1]{0}', space=sflag, size = 0x4, scoped, tag = 'scoped memory for tpu_custom_call.1']
    #allocation7 [shape = 'u8[32768]{0}', space=vmem, size = 0x8000, scoped, tag = 'output window, operand 0, single buffered']
    %7 = vsyncpa [#allocation3], 0
    %8 = vsyncpa [#allocation6], 0
    %9 = vsyncpa [#allocation4], 0
    // Predicated region
    $region2: #{tpu_custom_call.1} parent=1 // pred_check
      _
    $region3: #{tpu_custom_call.1} parent=1 // pred_check_branch
      %11 = sbr.rel (0) target = $region5
    $region4: #{tpu_custom_call.1} parent=1 // pred_region
      %s13 = ssub.s32 128, 128
      %14 = vsyncadd [#allocation3], %s13
      %s16 = sshll.u32 [#allocation2], 4
      %s17 = int_to_ptr.vmem [resolvable:$true] %s16
      %19 = dma.hbm_to_vmem [thread:$0]  %s0, 128, %s17, [#allocation3]
    $region5: #{tpu_custom_call.1} parent=1 // pred_fallthru
      _
    // Predicated region
    $region6: #{tpu_custom_call.1} parent=1 // pred_check
      _
    $region7: #{tpu_custom_call.1} parent=1 // pred_check_branch
      %21 = sbr.rel (0) target = $region9
    $region8: #{tpu_custom_call.1} parent=1 // pred_region
      %s23 = ssub.s32 16384, 16384
      %24 = vsyncadd [#allocation6], %s23
      %s25 = sshll.u32 [#allocation5], 4
      %s26 = int_to_ptr.vmem [resolvable:$true] %s25
      %31 = dma.hbm_to_vmem [thread:$0]  %s1, 16384, %s26, [#allocation6], 1024, 1024, 64
    $region9: #{tpu_custom_call.1} parent=1 // pred_fallthru
      _
    // Predicated region
    $region10: #{tpu_custom_call.1} parent=1 // pred_check
      _
    $region11: #{tpu_custom_call.1} parent=1 // pred_check_branch
      %33 = sbr.rel (0) target = $region13
    $region12: #{tpu_custom_call.1} parent=1 // pred_region
      %34 = dma.done [#allocation3], 128
    $region13: #{tpu_custom_call.1} parent=1 // pred_fallthru
      _
    // Predicated region
    $region14: #{tpu_custom_call.1} parent=1 // pred_check
      _
    $region15: #{tpu_custom_call.1} parent=1 // pred_check_branch
      %36 = sbr.rel (0) target = $region17
    $region16: #{tpu_custom_call.1} parent=1 // pred_region
      %37 = dma.done [#allocation6], 16384
    $region17: #{tpu_custom_call.1} parent=1 // pred_fallthru
      _
    %v38 = vld [vmem:[#allocation2] sm:$0xff]
    %v39 = vld [vmem:[#allocation5] sm:$0xff]
    %v40 = vld [vmem:[#allocation5 + $0x8] sm:$0xff]
    %v41 = vld [vmem:[#allocation5 + $0x10] sm:$0xff]
    %v42 = vld [vmem:[#allocation5 + $0x18] sm:$0xff]
    %v43 = vld [vmem:[#allocation5 + $0x20] sm:$0xff]
    %v44 = vld [vmem:[#allocation5 + $0x28] sm:$0xff]
    %v45 = vld [vmem:[#allocation5 + $0x30] sm:$0xff]
    %v46 = vld [vmem:[#allocation5 + $0x38] sm:$0xff]
    %v47 = vld [vmem:[#allocation5 + $0x40] sm:$0xff]
    %v48 = vld [vmem:[#allocation5 + $0x48] sm:$0xff]
    %v49 = vld [vmem:[#allocation5 + $0x50] sm:$0xff]
    %v50 = vld [vmem:[#allocation5 + $0x58] sm:$0xff]
    %v51 = vld [vmem:[#allocation5 + $0x60] sm:$0xff]
    %v52 = vld [vmem:[#allocation5 + $0x68] sm:$0xff]
    %v53 = vld [vmem:[#allocation5 + $0x70] sm:$0xff]
    %v54 = vld [vmem:[#allocation5 + $0x78] sm:$0xff]
    %v55 = vld [vmem:[#allocation5 + $0x80] sm:$0xff]
    %v56 = vld [vmem:[#allocation5 + $0x88] sm:$0xff]
    %v57 = vld [vmem:[#allocation5 + $0x90] sm:$0xff]
    %v58 = vld [vmem:[#allocation5 + $0x98] sm:$0xff]
    %v59 = vld [vmem:[#allocation5 + $0xa0] sm:$0xff]
    %v60 = vld [vmem:[#allocation5 + $0xa8] sm:$0xff]
    %v61 = vld [vmem:[#allocation5 + $0xb0] sm:$0xff]
    %v62 = vld [vmem:[#allocation5 + $0xb8] sm:$0xff]
    %v63 = vld [vmem:[#allocation5 + $0xc0] sm:$0xff]
    %v64 = vld [vmem:[#allocation5 + $0xc8] sm:$0xff]
    %v65 = vld [vmem:[#allocation5 + $0xd0] sm:$0xff]
    %v66 = vld [vmem:[#allocation5 + $0xd8] sm:$0xff]
    %v67 = vld [vmem:[#allocation5 + $0xe0] sm:$0xff]
    %v68 = vld [vmem:[#allocation5 + $0xe8] sm:$0xff]
    %v69 = vld [vmem:[#allocation5 + $0xf0] sm:$0xff]
    %v70 = vld [vmem:[#allocation5 + $0xf8] sm:$0xff]
    %v71 = vld [vmem:[#allocation5 + $0x100] sm:$0xff]
    %v72 = vld [vmem:[#allocation5 + $0x108] sm:$0xff]
    %v73 = vld [vmem:[#allocation5 + $0x110] sm:$0xff]
    %v74 = vld [vmem:[#allocation5 + $0x118] sm:$0xff]
    %v75 = vld [vmem:[#allocation5 + $0x120] sm:$0xff]
    %v76 = vld [vmem:[#allocation5 + $0x128] sm:$0xff]
    %v77 = vld [vmem:[#allocation5 + $0x130] sm:$0xff]
    %v78 = vld [vmem:[#allocation5 + $0x138] sm:$0xff]
    %v79 = vld [vmem:[#allocation5 + $0x140] sm:$0xff]
    %v80 = vld [vmem:[#allocation5 + $0x148] sm:$0xff]
    %v81 = vld [vmem:[#allocation5 + $0x150] sm:$0xff]
    %v82 = vld [vmem:[#allocation5 + $0x158] sm:$0xff]
    %v83 = vld [vmem:[#allocation5 + $0x160] sm:$0xff]
    %v84 = vld [vmem:[#allocation5 + $0x168] sm:$0xff]
    %v85 = vld [vmem:[#allocation5 + $0x170] sm:$0xff]
    %v86 = vld [vmem:[#allocation5 + $0x178] sm:$0xff]
    %v87 = vld [vmem:[#allocation5 + $0x180] sm:$0xff]
    %v88 = vld [vmem:[#allocation5 + $0x188] sm:$0xff]
    %v89 = vld [vmem:[#allocation5 + $0x190] sm:$0xff]
    %v90 = vld [vmem:[#allocation5 + $0x198] sm:$0xff]
    %v91 = vld [vmem:[#allocation5 + $0x1a0] sm:$0xff]
    %v92 = vld [vmem:[#allocation5 + $0x1a8] sm:$0xff]
    %v93 = vld [vmem:[#allocation5 + $0x1b0] sm:$0xff]
    %v94 = vld [vmem:[#allocation5 + $0x1b8] sm:$0xff]
    %v95 = vld [vmem:[#allocation5 + $0x1c0] sm:$0xff]
    %v96 = vld [vmem:[#allocation5 + $0x1c8] sm:$0xff]
    %v97 = vld [vmem:[#allocation5 + $0x1d0] sm:$0xff]
    %v98 = vld [vmem:[#allocation5 + $0x1d8] sm:$0xff]
    %v99 = vld [vmem:[#allocation5 + $0x1e0] sm:$0xff]
    %v100 = vld [vmem:[#allocation5 + $0x1e8] sm:$0xff]
    %v101 = vld [vmem:[#allocation5 + $0x1f0] sm:$0xff]
    %v102 = vld [vmem:[#allocation5 + $0x1f8] sm:$0xff]
    %v103 = vld [vmem:[#allocation5 + $0x200] sm:$0xff]
    %v104 = vld [vmem:[#allocation5 + $0x208] sm:$0xff]
    %v105 = vld [vmem:[#allocation5 + $0x210] sm:$0xff]
    %v106 = vld [vmem:[#allocation5 + $0x218] sm:$0xff]
    %v107 = vld [vmem:[#allocation5 + $0x220] sm:$0xff]
    %v108 = vld [vmem:[#allocation5 + $0x228] sm:$0xff]
    %v109 = vld [vmem:[#allocation5 + $0x230] sm:$0xff]
    %v110 = vld [vmem:[#allocation5 + $0x238] sm:$0xff]
    %v111 = vld [vmem:[#allocation5 + $0x240] sm:$0xff]
    %v112 = vld [vmem:[#allocation5 + $0x248] sm:$0xff]
    %v113 = vld [vmem:[#allocation5 + $0x250] sm:$0xff]
    %v114 = vld [vmem:[#allocation5 + $0x258] sm:$0xff]
    %v115 = vld [vmem:[#allocation5 + $0x260] sm:$0xff]
    %v116 = vld [vmem:[#allocation5 + $0x268] sm:$0xff]
    %v117 = vld [vmem:[#allocation5 + $0x270] sm:$0xff]
    %v118 = vld [vmem:[#allocation5 + $0x278] sm:$0xff]
    %v119 = vld [vmem:[#allocation5 + $0x280] sm:$0xff]
    %v120 = vld [vmem:[#allocation5 + $0x288] sm:$0xff]
    %v121 = vld [vmem:[#allocation5 + $0x290] sm:$0xff]
    %v122 = vld [vmem:[#allocation5 + $0x298] sm:$0xff]
    %v123 = vld [vmem:[#allocation5 + $0x2a0] sm:$0xff]
    %v124 = vld [vmem:[#allocation5 + $0x2a8] sm:$0xff]
    %v125 = vld [vmem:[#allocation5 + $0x2b0] sm:$0xff]
    %v126 = vld [vmem:[#allocation5 + $0x2b8] sm:$0xff]
    %v127 = vld [vmem:[#allocation5 + $0x2c0] sm:$0xff]
    %v128 = vld [vmem:[#allocation5 + $0x2c8] sm:$0xff]
    %v129 = vld [vmem:[#allocation5 + $0x2d0] sm:$0xff]
    %v130 = vld [vmem:[#allocation5 + $0x2d8] sm:$0xff]
    %v131 = vld [vmem:[#allocation5 + $0x2e0] sm:$0xff]
    %v132 = vld [vmem:[#allocation5 + $0x2e8] sm:$0xff]
    %v133 = vld [vmem:[#allocation5 + $0x2f0] sm:$0xff]
    %v134 = vld [vmem:[#allocation5 + $0x2f8] sm:$0xff]
    %v135 = vld [vmem:[#allocation5 + $0x300] sm:$0xff]
    %v136 = vld [vmem:[#allocation5 + $0x308] sm:$0xff]
    %v137 = vld [vmem:[#allocation5 + $0x310] sm:$0xff]
    %v138 = vld [vmem:[#allocation5 + $0x318] sm:$0xff]
    %v139 = vld [vmem:[#allocation5 + $0x320] sm:$0xff]
    %v140 = vld [vmem:[#allocation5 + $0x328] sm:$0xff]
    %v141 = vld [vmem:[#allocation5 + $0x330] sm:$0xff]
    %v142 = vld [vmem:[#allocation5 + $0x338] sm:$0xff]
    %v143 = vld [vmem:[#allocation5 + $0x340] sm:$0xff]
    %v144 = vld [vmem:[#allocation5 + $0x348] sm:$0xff]
    %v145 = vld [vmem:[#allocation5 + $0x350] sm:$0xff]
    %v146 = vld [vmem:[#allocation5 + $0x358] sm:$0xff]
    %v147 = vld [vmem:[#allocation5 + $0x360] sm:$0xff]
    %v148 = vld [vmem:[#allocation5 + $0x368] sm:$0xff]
    %v149 = vld [vmem:[#allocation5 + $0x370] sm:$0xff]
    %v150 = vld [vmem:[#allocation5 + $0x378] sm:$0xff]
    %v151 = vld [vmem:[#allocation5 + $0x380] sm:$0xff]
    %v152 = vld [vmem:[#allocation5 + $0x388] sm:$0xff]
    %v153 = vld [vmem:[#allocation5 + $0x390] sm:$0xff]
    %v154 = vld [vmem:[#allocation5 + $0x398] sm:$0xff]
    %v155 = vld [vmem:[#allocation5 + $0x3a0] sm:$0xff]
    %v156 = vld [vmem:[#allocation5 + $0x3a8] sm:$0xff]
    %v157 = vld [vmem:[#allocation5 + $0x3b0] sm:$0xff]
    %v158 = vld [vmem:[#allocation5 + $0x3b8] sm:$0xff]
    %v159 = vld [vmem:[#allocation5 + $0x3c0] sm:$0xff]
    %v160 = vld [vmem:[#allocation5 + $0x3c8] sm:$0xff]
    %v161 = vld [vmem:[#allocation5 + $0x3d0] sm:$0xff]
    %v162 = vld [vmem:[#allocation5 + $0x3d8] sm:$0xff]
    %v163 = vld [vmem:[#allocation5 + $0x3e0] sm:$0xff]
    %v164 = vld [vmem:[#allocation5 + $0x3e8] sm:$0xff]
    %v165 = vld [vmem:[#allocation5 + $0x3f0] sm:$0xff]
    %v166 = vld [vmem:[#allocation5 + $0x3f8] sm:$0xff]
    %167 = vmatprep.subr.mxu0 %v160
    %168 = vmatpush1.msra.mxu0 %v159
    %169 = vmatprep.subr.mxu0 %v152
    %170 = vmatpush1.msra.mxu0 %v151
    %171 = vmatprep.subr.mxu0 %v144
    %172 = vmatpush1.msra.mxu0 %v143
    %173 = vmatprep.subr.mxu0 %v136
    %174 = vmatpush1.msra.mxu0 %v135
    %175 = vmatprep.subr.mxu0 %v128
    %176 = vmatpush1.msra.mxu0 %v127
    %177 = vmatprep.subr.mxu0 %v120
    %178 = vmatpush1.msra.mxu0 %v119
    %179 = vmatprep.subr.mxu0 %v112
    %180 = vmatpush1.msra.mxu0 %v111
    %181 = vmatprep.subr.mxu0 %v104
    %182 = vmatpush1.msra.mxu0 %v103
    %183 = vmatprep.subr.mxu0 %v96
    %184 = vmatpush1.msra.mxu0 %v95
    %185 = vmatprep.subr.mxu0 %v88
    %186 = vmatpush1.msra.mxu0 %v87
    %187 = vmatprep.subr.mxu0 %v80
    %188 = vmatpush1.msra.mxu0 %v79
    %189 = vmatprep.subr.mxu0 %v72
    %190 = vmatpush1.msra.mxu0 %v71
    %191 = vmatprep.subr.mxu0 %v64
    %192 = vmatpush1.msra.mxu0 %v63
    %193 = vmatprep.subr.mxu0 %v56
    %194 = vmatpush1.msra.mxu0 %v55
    %195 = vmatprep.subr.mxu0 %v48
    %196 = vmatpush1.msra.mxu0 %v47
    %197 = vmatprep.subr.mxu0 %v40
    %198 = vmatpush1.msra.mxu0 %v39
    %199 = vmatprep.subr.mxu0 0.0
    %200 = vmatpush2.msra.mxu0 0.0
    %201 = vmatprep.subr.mxu0 0.0
    %202 = vmatpush2.msra.mxu0 0.0
    %203 = vmatprep.subr.mxu0 0.0
    %204 = vmatpush2.msra.mxu0 0.0
    %205 = vmatprep.subr.mxu0 0.0
    %206 = vmatpush2.msra.mxu0 0.0
    %207 = vmatprep.subr.mxu0 0.0
    %208 = vmatpush2.msra.mxu0 0.0
    %209 = vmatprep.subr.mxu0 0.0
    %210 = vmatpush2.msra.mxu0 0.0
    %211 = vmatprep.subr.mxu0 0.0
    %212 = vmatpush2.msra.mxu0 0.0
    %213 = vmatprep.subr.mxu0 0.0
    %214 = vmatpush2.msra.mxu0 0.0
    %215 = vmatprep.subr.mxu0 0.0
    %216 = vmatpush2.msra.mxu0 0.0
    %217 = vmatprep.subr.mxu0 0.0
    %218 = vmatpush2.msra.mxu0 0.0
    %219 = vmatprep.subr.mxu0 0.0
    %220 = vmatpush2.msra.mxu0 0.0
    %221 = vmatprep.subr.mxu0 0.0
    %222 = vmatpush2.msra.mxu0 0.0
    %223 = vmatprep.subr.mxu0 0.0
    %224 = vmatpush2.msra.mxu0 0.0
    %225 = vmatprep.subr.mxu0 0.0
    %226 = vmatpush2.msra.mxu0 0.0
    %227 = vmatprep.subr.mxu0 0.0
    %228 = vmatpush2.msra.mxu0 0.0
    %229 = vmatprep.subr.mxu0 0.0
    %230 = vmatpush2.msra.mxu0 0.0
    %231 = vmatprep.mubr.f32.mxu0 0.0
    %232 = vmatmul.mubr.f32.gmra.mxu0 %v38
    %v233 = vpop.f32.mrf.mxu0
    %v234 = vadd.f32 0.0, %v233
    %v235 = vpop.f32.mrf.mxu0
    %v236 = vadd.f32 0.0, %v235
    %237 = vdwg.mxu0
    %238 = vmatprep.subr.mxu0 %v162
    %239 = vmatpush1.msra.mxu0 %v161
    %240 = vmatprep.subr.mxu0 %v154
    %241 = vmatpush1.msra.mxu0 %v153
    %242 = vmatprep.subr.mxu0 %v146
    %243 = vmatpush1.msra.mxu0 %v145
    %244 = vmatprep.subr.mxu0 %v138
    %245 = vmatpush1.msra.mxu0 %v137
    %246 = vmatprep.subr.mxu0 %v130
    %247 = vmatpush1.msra.mxu0 %v129
    %248 = vmatprep.subr.mxu0 %v122
    %249 = vmatpush1.msra.mxu0 %v121
    %250 = vmatprep.subr.mxu0 %v114
    %251 = vmatpush1.msra.mxu0 %v113
    %252 = vmatprep.subr.mxu0 %v106
    %253 = vmatpush1.msra.mxu0 %v105
    %254 = vmatprep.subr.mxu0 %v98
    %255 = vmatpush1.msra.mxu0 %v97
    %256 = vmatprep.subr.mxu0 %v90
    %257 = vmatpush1.msra.mxu0 %v89
    %258 = vmatprep.subr.mxu0 %v82
    %259 = vmatpush1.msra.mxu0 %v81
    %260 = vmatprep.subr.mxu0 %v74
    %261 = vmatpush1.msra.mxu0 %v73
    %262 = vmatprep.subr.mxu0 %v66
    %263 = vmatpush1.msra.mxu0 %v65
    %264 = vmatprep.subr.mxu0 %v58
    %265 = vmatpush1.msra.mxu0 %v57
    %266 = vmatprep.subr.mxu0 %v50
    %267 = vmatpush1.msra.mxu0 %v49
    %268 = vmatprep.subr.mxu0 %v42
    %269 = vmatpush1.msra.mxu0 %v41
    %270 = vmatprep.subr.mxu0 0.0
    %271 = vmatpush2.msra.mxu0 0.0
    %272 = vmatprep.subr.mxu0 0.0
    %273 = vmatpush2.msra.mxu0 0.0
    %274 = vmatprep.subr.mxu0 0.0
    %275 = vmatpush2.msra.mxu0 0.0
    %276 = vmatprep.subr.mxu0 0.0
    %277 = vmatpush2.msra.mxu0 0.0
    %278 = vmatprep.subr.mxu0 0.0
    %279 = vmatpush2.msra.mxu0 0.0
    %280 = vmatprep.subr.mxu0 0.0
    %281 = vmatpush2.msra.mxu0 0.0
    %282 = vmatprep.subr.mxu0 0.0
    %283 = vmatpush2.msra.mxu0 0.0
    %284 = vmatprep.subr.mxu0 0.0
    %285 = vmatpush2.msra.mxu0 0.0
    %286 = vmatprep.subr.mxu0 0.0
    %287 = vmatpush2.msra.mxu0 0.0
    %288 = vmatprep.subr.mxu0 0.0
    %289 = vmatpush2.msra.mxu0 0.0
    %290 = vmatprep.subr.mxu0 0.0
    %291 = vmatpush2.msra.mxu0 0.0
    %292 = vmatprep.subr.mxu0 0.0
    %293 = vmatpush2.msra.mxu0 0.0
    %294 = vmatprep.subr.mxu0 0.0
    %295 = vmatpush2.msra.mxu0 0.0
    %296 = vmatprep.subr.mxu0 0.0
    %297 = vmatpush2.msra.mxu0 0.0
    %298 = vmatprep.subr.mxu0 0.0
    %299 = vmatpush2.msra.mxu0 0.0
    %300 = vmatprep.subr.mxu0 0.0
    %301 = vmatpush2.msra.mxu0 0.0
    %302 = vmatprep.mubr.f32.mxu0 0.0
    %303 = vmatmul.mubr.f32.gmra.mxu0 %v38
    %v304 = vpop.f32.mrf.mxu0
    %v305 = vadd.f32 0.0, %v304
    %v306 = vpop.f32.mrf.mxu0
    %v307 = vadd.f32 0.0, %v306
    %308 = vdwg.mxu0
    %309 = vmatprep.subr.mxu0 %v164
    %310 = vmatpush1.msra.mxu0 %v163
    %311 = vmatprep.subr.mxu0 %v156
    %312 = vmatpush1.msra.mxu0 %v155
    %313 = vmatprep.subr.mxu0 %v148
    %314 = vmatpush1.msra.mxu0 %v147
    %315 = vmatprep.subr.mxu0 %v140
    %316 = vmatpush1.msra.mxu0 %v139
    %317 = vmatprep.subr.mxu0 %v132
    %318 = vmatpush1.msra.mxu0 %v131
    %319 = vmatprep.subr.mxu0 %v124
    %320 = vmatpush1.msra.mxu0 %v123
    %321 = vmatprep.subr.mxu0 %v116
    %322 = vmatpush1.msra.mxu0 %v115
    %323 = vmatprep.subr.mxu0 %v108
    %324 = vmatpush1.msra.mxu0 %v107
    %325 = vmatprep.subr.mxu0 %v100
    %326 = vmatpush1.msra.mxu0 %v99
    %327 = vmatprep.subr.mxu0 %v92
    %328 = vmatpush1.msra.mxu0 %v91
    %329 = vmatprep.subr.mxu0 %v84
    %330 = vmatpush1.msra.mxu0 %v83
    %331 = vmatprep.subr.mxu0 %v76
    %332 = vmatpush1.msra.mxu0 %v75
    %333 = vmatprep.subr.mxu0 %v68
    %334 = vmatpush1.msra.mxu0 %v67
    %335 = vmatprep.subr.mxu0 %v60
    %336 = vmatpush1.msra.mxu0 %v59
    %337 = vmatprep.subr.mxu0 %v52
    %338 = vmatpush1.msra.mxu0 %v51
    %339 = vmatprep.subr.mxu0 %v44
    %340 = vmatpush1.msra.mxu0 %v43
    %341 = vmatprep.subr.mxu0 0.0
    %342 = vmatpush2.msra.mxu0 0.0
    %343 = vmatprep.subr.mxu0 0.0
    %344 = vmatpush2.msra.mxu0 0.0
    %345 = vmatprep.subr.mxu0 0.0
    %346 = vmatpush2.msra.mxu0 0.0
    %347 = vmatprep.subr.mxu0 0.0
    %348 = vmatpush2.msra.mxu0 0.0
    %349 = vmatprep.subr.mxu0 0.0
    %350 = vmatpush2.msra.mxu0 0.0
    %351 = vmatprep.subr.mxu0 0.0
    %352 = vmatpush2.msra.mxu0 0.0
    %353 = vmatprep.subr.mxu0 0.0
    %354 = vmatpush2.msra.mxu0 0.0
    %355 = vmatprep.subr.mxu0 0.0
    %356 = vmatpush2.msra.mxu0 0.0
    %357 = vmatprep.subr.mxu0 0.0
    %358 = vmatpush2.msra.mxu0 0.0
    %359 = vmatprep.subr.mxu0 0.0
    %360 = vmatpush2.msra.mxu0 0.0
    %361 = vmatprep.subr.mxu0 0.0
    %362 = vmatpush2.msra.mxu0 0.0
    %363 = vmatprep.subr.mxu0 0.0
    %364 = vmatpush2.msra.mxu0 0.0
    %365 = vmatprep.subr.mxu0 0.0
    %366 = vmatpush2.msra.mxu0 0.0
    %367 = vmatprep.subr.mxu0 0.0
    %368 = vmatpush2.msra.mxu0 0.0
    %369 = vmatprep.subr.mxu0 0.0
    %370 = vmatpush2.msra.mxu0 0.0
    %371 = vmatprep.subr.mxu0 0.0
    %372 = vmatpush2.msra.mxu0 0.0
    %373 = vmatprep.mubr.f32.mxu0 0.0
    %374 = vmatmul.mubr.f32.gmra.mxu0 %v38
    %v375 = vpop.f32.mrf.mxu0
    %v376 = vadd.f32 0.0, %v375
    %v377 = vpop.f32.mrf.mxu0
    %v378 = vadd.f32 0.0, %v377
    %379 = vdwg.mxu0
    %380 = vmatprep.subr.mxu0 %v166
    %381 = vmatpush1.msra.mxu0 %v165
    %382 = vmatprep.subr.mxu0 %v158
    %383 = vmatpush1.msra.mxu0 %v157
    %384 = vmatprep.subr.mxu0 %v150
    %385 = vmatpush1.msra.mxu0 %v149
    %386 = vmatprep.subr.mxu0 %v142
    %387 = vmatpush1.msra.mxu0 %v141
    %388 = vmatprep.subr.mxu0 %v134
    %389 = vmatpush1.msra.mxu0 %v133
    %390 = vmatprep.subr.mxu0 %v126
    %391 = vmatpush1.msra.mxu0 %v125
    %392 = vmatprep.subr.mxu0 %v118
    %393 = vmatpush1.msra.mxu0 %v117
    %394 = vmatprep.subr.mxu0 %v110
    %395 = vmatpush1.msra.mxu0 %v109
    %396 = vmatprep.subr.mxu0 %v102
    %397 = vmatpush1.msra.mxu0 %v101
    %398 = vmatprep.subr.mxu0 %v94
    %399 = vmatpush1.msra.mxu0 %v93
    %400 = vmatprep.subr.mxu0 %v86
    %401 = vmatpush1.msra.mxu0 %v85
    %402 = vmatprep.subr.mxu0 %v78
    %403 = vmatpush1.msra.mxu0 %v77
    %404 = vmatprep.subr.mxu0 %v70
    %405 = vmatpush1.msra.mxu0 %v69
    %406 = vmatprep.subr.mxu0 %v62
    %407 = vmatpush1.msra.mxu0 %v61
    %408 = vmatprep.subr.mxu0 %v54
    %409 = vmatpush1.msra.mxu0 %v53
    %410 = vmatprep.subr.mxu0 %v46
    %411 = vmatpush1.msra.mxu0 %v45
    %412 = vmatprep.subr.mxu0 0.0
    %413 = vmatpush2.msra.mxu0 0.0
    %414 = vmatprep.subr.mxu0 0.0
    %415 = vmatpush2.msra.mxu0 0.0
    %416 = vmatprep.subr.mxu0 0.0
    %417 = vmatpush2.msra.mxu0 0.0
    %418 = vmatprep.subr.mxu0 0.0
    %419 = vmatpush2.msra.mxu0 0.0
    %420 = vmatprep.subr.mxu0 0.0
    %421 = vmatpush2.msra.mxu0 0.0
    %422 = vmatprep.subr.mxu0 0.0
    %423 = vmatpush2.msra.mxu0 0.0
    %424 = vmatprep.subr.mxu0 0.0
    %425 = vmatpush2.msra.mxu0 0.0
    %426 = vmatprep.subr.mxu0 0.0
    %427 = vmatpush2.msra.mxu0 0.0
    %428 = vmatprep.subr.mxu0 0.0
    %429 = vmatpush2.msra.mxu0 0.0
    %430 = vmatprep.subr.mxu0 0.0
    %431 = vmatpush2.msra.mxu0 0.0
    %432 = vmatprep.subr.mxu0 0.0
    %433 = vmatpush2.msra.mxu0 0.0
    %434 = vmatprep.subr.mxu0 0.0
    %435 = vmatpush2.msra.mxu0 0.0
    %436 = vmatprep.subr.mxu0 0.0
    %437 = vmatpush2.msra.mxu0 0.0
    %438 = vmatprep.subr.mxu0 0.0
    %439 = vmatpush2.msra.mxu0 0.0
    %440 = vmatprep.subr.mxu0 0.0
    %441 = vmatpush2.msra.mxu0 0.0
    %442 = vmatprep.subr.mxu0 0.0
    %443 = vmatpush2.msra.mxu0 0.0
    %444 = vmatprep.mubr.f32.mxu0 0.0
    %445 = vmatmul.mubr.f32.gmra.mxu0 %v38
    %v446 = vpop.f32.mrf.mxu0
    %v447 = vadd.f32 0.0, %v446
    %v448 = vpop.f32.mrf.mxu0
    %v449 = vadd.f32 0.0, %v448
    %450 = vdwg.mxu0
    %451 = vst [vmem:[#allocation7] sm:$0xff] %v234
    %452 = vst [vmem:[#allocation7 + $0x8] sm:$0xff] %v236
    %453 = vst [vmem:[#allocation7 + $0x10] sm:$0xff] %v305
    %454 = vst [vmem:[#allocation7 + $0x18] sm:$0xff] %v307
    %455 = vst [vmem:[#allocation7 + $0x20] sm:$0xff] %v376
    %456 = vst [vmem:[#allocation7 + $0x28] sm:$0xff] %v378
    %457 = vst [vmem:[#allocation7 + $0x30] sm:$0xff] %v447
    %458 = vst [vmem:[#allocation7 + $0x38] sm:$0xff] %v449
    // Predicated region
    $region18: #{tpu_custom_call.1} parent=1 // pred_check
      _
    $region19: #{tpu_custom_call.1} parent=1 // pred_check_branch
      %460 = sbr.rel (0) target = $region21
    $region20: #{tpu_custom_call.1} parent=1 // pred_region
      %s462 = ssub.s32 1024, 1024
      %463 = vsyncadd [#allocation4], %s462
      %s465 = sshll.u32 [#allocation7], 4
      %s466 = int_to_ptr.vmem [resolvable:$true] %s465
      %468 = dma.vmem_to_hbm [thread:$0]  %s466, 1024, %s2, [#allocation4]
    $region21: #{tpu_custom_call.1} parent=1 // pred_fallthru
      _
    // Predicated region
    $region22: #{tpu_custom_call.1} parent=1 // pred_check
      _
    $region23: #{tpu_custom_call.1} parent=1 // pred_check_branch
      %470 = sbr.rel (0) target = $region25
    $region24: #{tpu_custom_call.1} parent=1 // pred_region
      %471 = dma.done [#allocation4], 1024
    $region25: #{tpu_custom_call.1} parent=1 // pred_fallthru
      _
    %472 = vsyncpa [#allocation3], 1
    %473 = vsyncpa [#allocation6], 1
    %474 = vsyncpa [#allocation4], 1

</llo_original>
